<compile_context>
chip_gen: v5e
topology: v5e:2x2
jax: 0.10.0
libtpu: 0.0.40
codegen_flags: <defaults>
</compile_context>

<pallas_src>
import functools

import numpy as np
import jax
import jax.numpy as jnp
from jax import lax
from jax.experimental import pallas as pl
from jax.experimental.pallas import tpu as pltpu


def _round_up(x: int, m: int) -> int:
    return (x + m - 1) // m * m


def _srl(v, k: int):
    # logical right shift on int32 (bit pattern == uint32 semantics)
    return lax.shift_right_logical(v, np.int32(k))


def _fused_dropout_add_ln_kernel(
    seed_ref,      # SMEM scalar-prefetch: (1,) int32 seed
    x1_ref,        # (tile_rows, H) input1 tile
    x2_ref,        # (tile_rows, H) input2 tile
    w_ref,         # (1, H) layernorm weight
    b_ref,         # (1, H) layernorm bias
    o_ref,         # (tile_rows, H) output tile
    *,
    dropout_prob: float,
    training: bool,
    eps: float,
):
    x1 = x1_ref[...].astype(jnp.float32)
    x2 = x2_ref[...].astype(jnp.float32)

    if training and dropout_prob > 0.0:
        if dropout_prob >= 1.0:
            dropped = jnp.zeros_like(x1)
        else:
            tr, h = x1_ref.shape
            # Stateless counter-based hash (lowbias32-style) on the global
            # element index.  Pure integer VPU ops; two's-complement int32
            # arithmetic wraps identically to uint32 mod 2^32.
            row = lax.broadcasted_iota(jnp.int32, (tr, h), 0) + pl.program_id(0) * tr
            col = lax.broadcasted_iota(jnp.int32, (tr, h), 1)
            x = row * np.int32(h) + col
            x = x + seed_ref[0] * np.int32(-1640531527)     # seed * 0x9E3779B9
            x = x ^ _srl(x, 16)
            x = x * np.int32(2146121005)                    # 0x7feb352d
            x = x ^ _srl(x, 15)
            x = x * np.int32(-2073401717)                   # 0x846ca68b
            x = x ^ _srl(x, 16)
            # Top 24 bits -> nonnegative int32 in [0, 2^24); integer-threshold
            # compare (drop iff r24 < round(p * 2^24)).
            r24 = _srl(x, 8)
            thresh = min(max(int(round(dropout_prob * float(1 << 24))), 0), 1 << 24)
            keep = r24 >= np.int32(thresh)
            scale = np.float32(1.0 / (1.0 - dropout_prob))
            dropped = jnp.where(keep, x1 * scale, np.float32(0.0))
    else:
        dropped = x1

    y = dropped + x2

    # LayerNorm over hidden (lane axis); f32 stats, two-pass (stable) form,
    # matching torch.nn.functional.layer_norm (biased variance).
    mean = jnp.mean(y, axis=-1, keepdims=True)
    centered = y - mean
    var = jnp.mean(centered * centered, axis=-1, keepdims=True)
    inv_std = lax.rsqrt(var + np.float32(eps))
    norm = centered * inv_std

    w = w_ref[...].astype(jnp.float32)   # (1, H), broadcasts over rows
    b = b_ref[...].astype(jnp.float32)
    o_ref[...] = (norm * w + b).astype(o_ref.dtype)


def fused_dropout_add_layernorm(
    input1, input2, weight, bias, *, dropout_prob, training, eps, seed=0,
    tile_rows=512,
):
    assert input1.shape == input2.shape
    hidden = input1.shape[-1]
    assert weight.shape == (hidden,) and bias.shape == (hidden,)

    orig_shape = input1.shape
    x1 = input1.reshape(-1, hidden)
    x2 = input2.reshape(-1, hidden)
    rows = x1.shape[0]

    # --- tile sizing: large row tiles amortize per-step pipeline overhead,
    #     capped so the double-buffered footprint fits v7x's 64 MiB VMEM. ---
    row_align = 16  # multiple of 8 required; 16 keeps bf16 sublane packing clean
    itemsize = jnp.dtype(input1.dtype).itemsize
    # 3 tensor streams x 2 pipeline buffers in I/O dtype + ~6 f32 temporaries.
    per_row_bytes = hidden * (3 * 2 * itemsize + 6 * 4)
    budget_bytes = 40 * 1024 * 1024
    max_tile_by_vmem = max(row_align,
                           (budget_bytes // per_row_bytes) // row_align * row_align)
    tile_rows = min(int(tile_rows), _round_up(rows, row_align), max_tile_by_vmem)
    tile_rows = max(row_align, (tile_rows // row_align) * row_align)

    # No padding: Pallas masks the partial boundary block (rows are independent,
    # so garbage in the out-of-bounds region never touches valid outputs).
    grid = (pl.cdiv(rows, tile_rows),)

    w2 = weight.reshape(1, hidden)
    b2 = bias.reshape(1, hidden)
    seed_arr = jnp.asarray([seed], dtype=jnp.int32)

    kernel = functools.partial(
        _fused_dropout_add_ln_kernel,
        dropout_prob=float(dropout_prob),
        training=bool(training),
        eps=float(eps),
    )

    out = pl.pallas_call(
        kernel,
        out_shape=jax.ShapeDtypeStruct((rows, hidden), input1.dtype),
        grid_spec=pltpu.PrefetchScalarGridSpec(
            num_scalar_prefetch=1,
            grid=grid,
            in_specs=[
                pl.BlockSpec((tile_rows, hidden), lambda i, seed: (i, 0)),
                pl.BlockSpec((tile_rows, hidden), lambda i, seed: (i, 0)),
                pl.BlockSpec((1, hidden), lambda i, seed: (0, 0)),
                pl.BlockSpec((1, hidden), lambda i, seed: (0, 0)),
            ],
            out_specs=pl.BlockSpec((tile_rows, hidden), lambda i, seed: (i, 0)),
        ),
        compiler_params=pltpu.CompilerParams(
            dimension_semantics=("parallel",),      # grid steps independent
            vmem_limit_bytes=48 * 1024 * 1024,      # unlock big tiles; < v7x 64 MiB
        ),
    )(seed_arr, x1, x2, w2, b2)

    return out.reshape(orig_shape)


class FusedDropoutAddLayerNormPallas:
    """Mirror of the PyTorch module: LayerNorm(size, eps) params + dropout prob."""

    def __init__(self, size, dropout_prob, eps=1e-5, training=True):
        # torch.nn.LayerNorm defaults: weight = ones, bias = zeros.
        self.weight = jnp.ones((size,), dtype=jnp.float32)
        self.bias = jnp.zeros((size,), dtype=jnp.float32)
        self.dropout_prob = dropout_prob
        self.eps = eps
        self.training = training

    def __call__(self, input1, input2, seed=0, tile_rows=512):
        return fused_dropout_add_layernorm(
            input1, input2, self.weight, self.bias,
            dropout_prob=self.dropout_prob, training=self.training,
            eps=self.eps, seed=seed, tile_rows=tile_rows,
        )


def _ln_reference(y, weight, bias, eps):
    mean = jnp.mean(y, axis=-1, keepdims=True)
    var = jnp.mean((y - mean) ** 2, axis=-1, keepdims=True)
    return (y - mean) * lax.rsqrt(var + eps) * weight + bias


if __name__ == "__main__":
    batch, seq, hidden = 2, 8, 128
    key = jax.random.PRNGKey(0)
    k1, k2, k3, k4 = jax.random.split(key, 4)
    input1 = jax.random.normal(k1, (batch, seq, hidden), dtype=jnp.float32)
    input2 = jax.random.normal(k2, (batch, seq, hidden), dtype=jnp.float32)

    # Training mode (dropout active): check shape / finiteness.
    module = FusedDropoutAddLayerNormPallas(size=hidden, dropout_prob=0.1,
                                            eps=1e-5, training=True)
    out = module(input1, input2, seed=0)
    jax.block_until_ready(out)
    assert out.shape == (batch, seq, hidden)
    assert bool(jnp.all(jnp.isfinite(out)))

    # Eval mode (dropout disabled -> deterministic): compare to pure-JAX reference.
    module_eval = FusedDropoutAddLayerNormPallas(size=hidden, dropout_prob=0.1,
                                                 eps=1e-5, training=False)
    out_eval = module_eval(input1, input2)
    jax.block_until_ready(out_eval)
    ref = _ln_reference(input1 + input2, module_eval.weight, module_eval.bias, 1e-5)
    assert jnp.allclose(out_eval, ref, atol=1e-4, rtol=1e-4)

    # Non-divisible row count (exercises the masked boundary block), eval mode.
    rows_odd_shape = (3, 5, hidden)   # 15 rows, tile of 16
    a = jax.random.normal(k3, rows_odd_shape, dtype=jnp.float32)
    b = jax.random.normal(k4, rows_odd_shape, dtype=jnp.float32)
    out_odd = module_eval(a, b)
    jax.block_until_ready(out_odd)
    ref_odd = _ln_reference(a + b, module_eval.weight, module_eval.bias, 1e-5)
    assert jnp.allclose(out_odd, ref_odd, atol=1e-4, rtol=1e-4)

    print("KERNEL_OK")
</pallas_src>

<mosaic_0001>
module attributes {stable_mosaic.version = 11 : i64} {
  func.func @_fused_dropout_add_ln_kernel(%arg0: i32, %arg1: memref<1xi32, #tpu.memory_space<smem>>, %arg2: memref<16x128xf32, #tpu.memory_space<vmem>>, %arg3: memref<16x128xf32, #tpu.memory_space<vmem>>, %arg4: memref<1x128xf32, #tpu.memory_space<vmem>>, %arg5: memref<1x128xf32, #tpu.memory_space<vmem>>, %arg6: memref<16x128xf32, #tpu.memory_space<vmem>>) attributes {dimension_semantics = [#tpu.dimension_semantics<parallel>], iteration_bounds = array<i64: 1>, scalar_prefetch = 1 : i64, scratch_operands = 0 : i64, tpu.core_type = #tpu.core_type<tc>, window_params = [{transform_indices = @transform_0, window_bounds = array<i64: 16, 128>}, {transform_indices = @transform_1, window_bounds = array<i64: 16, 128>}, {pipeline_mode = #tpu.pipeline_mode<synchronous>, transform_indices = @transform_2, window_bounds = array<i64: 1, 128>}, {pipeline_mode = #tpu.pipeline_mode<synchronous>, transform_indices = @transform_3, window_bounds = array<i64: 1, 128>}, {transform_indices = @transform_4, window_bounds = array<i64: 16, 128>}]} {
    %c0 = arith.constant 0 : index
    %c0_0 = arith.constant 0 : index
    %0 = vector.load %arg2[%c0, %c0_0] : memref<16x128xf32, #tpu.memory_space<vmem>>, vector<16x128xf32>
    %c0_1 = arith.constant 0 : index
    %c0_2 = arith.constant 0 : index
    %1 = vector.load %arg3[%c0_1, %c0_2] : memref<16x128xf32, #tpu.memory_space<vmem>>, vector<16x128xf32>
    %2 = tpu.iota {dimensions = array<i32: 0>} : vector<16x128xi32>
    %c16_i32 = arith.constant 16 : i32
    %3 = arith.muli %arg0, %c16_i32 : i32
    %4 = vector.broadcast %3 : i32 to vector<16x128xi32>
    %5 = arith.addi %2, %4 : vector<16x128xi32>
    %6 = tpu.iota {dimensions = array<i32: 1>} : vector<16x128xi32>
    %c128_i32 = arith.constant 128 : i32
    %7 = vector.broadcast %c128_i32 : i32 to vector<16x128xi32>
    %8 = arith.muli %5, %7 : vector<16x128xi32>
    %9 = arith.addi %8, %6 : vector<16x128xi32>
    %c0_3 = arith.constant 0 : index
    %10 = memref.load %arg1[%c0_3] : memref<1xi32, #tpu.memory_space<smem>>
    %c-1640531527_i32 = arith.constant -1640531527 : i32
    %11 = arith.muli %10, %c-1640531527_i32 : i32
    %12 = vector.broadcast %11 : i32 to vector<16x128xi32>
    %13 = arith.addi %9, %12 : vector<16x128xi32>
    %c16_i32_4 = arith.constant 16 : i32
    %14 = vector.broadcast %c16_i32_4 : i32 to vector<16x128xi32>
    %15 = arith.shrui %13, %14 : vector<16x128xi32>
    %16 = arith.xori %13, %15 : vector<16x128xi32>
    %c2146121005_i32 = arith.constant 2146121005 : i32
    %17 = vector.broadcast %c2146121005_i32 : i32 to vector<16x128xi32>
    %18 = arith.muli %16, %17 : vector<16x128xi32>
    %c15_i32 = arith.constant 15 : i32
    %19 = vector.broadcast %c15_i32 : i32 to vector<16x128xi32>
    %20 = arith.shrui %18, %19 : vector<16x128xi32>
    %21 = arith.xori %18, %20 : vector<16x128xi32>
    %c-2073401717_i32 = arith.constant -2073401717 : i32
    %22 = vector.broadcast %c-2073401717_i32 : i32 to vector<16x128xi32>
    %23 = arith.muli %21, %22 : vector<16x128xi32>
    %c16_i32_5 = arith.constant 16 : i32
    %24 = vector.broadcast %c16_i32_5 : i32 to vector<16x128xi32>
    %25 = arith.shrui %23, %24 : vector<16x128xi32>
    %26 = arith.xori %23, %25 : vector<16x128xi32>
    %c8_i32 = arith.constant 8 : i32
    %27 = vector.broadcast %c8_i32 : i32 to vector<16x128xi32>
    %28 = arith.shrui %26, %27 : vector<16x128xi32>
    %c1677722_i32 = arith.constant 1677722 : i32
    %29 = vector.broadcast %c1677722_i32 : i32 to vector<16x128xi32>
    %30 = arith.cmpi sge, %28, %29 : vector<16x128xi32>
    %cst = arith.constant 1.11111116 : f32
    %31 = vector.broadcast %cst : f32 to vector<16x128xf32>
    %32 = arith.mulf %0, %31 : vector<16x128xf32>
    %cst_6 = arith.constant 0.000000e+00 : f32
    %33 = vector.broadcast %cst_6 : f32 to vector<16x128xf32>
    %34 = arith.select %30, %32, %33 : vector<16x128xi1>, vector<16x128xf32>
    %35 = arith.addf %34, %1 : vector<16x128xf32>
    %cst_7 = arith.constant dense<0.000000e+00> : vector<16xf32>
    %36 = vector.multi_reduction <add>, %35, %cst_7 [1] : vector<16x128xf32> to vector<16xf32>
    %37 = vector.shape_cast %36 : vector<16xf32> to vector<16x1xf32>
    %cst_8 = arith.constant 1.280000e+02 : f32
    %38 = vector.broadcast %cst_8 : f32 to vector<16x1xf32>
    %39 = arith.divf %37, %38 : vector<16x1xf32>
    %40 = vector.broadcast %39 : vector<16x1xf32> to vector<16x128xf32>
    %41 = arith.subf %35, %40 : vector<16x128xf32>
    %42 = arith.mulf %41, %41 : vector<16x128xf32>
    %cst_9 = arith.constant dense<0.000000e+00> : vector<16xf32>
    %43 = vector.multi_reduction <add>, %42, %cst_9 [1] : vector<16x128xf32> to vector<16xf32>
    %44 = vector.shape_cast %43 : vector<16xf32> to vector<16x1xf32>
    %cst_10 = arith.constant 1.280000e+02 : f32
    %45 = vector.broadcast %cst_10 : f32 to vector<16x1xf32>
    %46 = arith.divf %44, %45 : vector<16x1xf32>
    %cst_11 = arith.constant 9.99999974E-6 : f32
    %47 = vector.broadcast %cst_11 : f32 to vector<16x1xf32>
    %48 = arith.addf %46, %47 : vector<16x1xf32>
    %49 = math.rsqrt %48 : vector<16x1xf32>
    %50 = vector.broadcast %49 : vector<16x1xf32> to vector<16x128xf32>
    %51 = arith.mulf %41, %50 : vector<16x128xf32>
    %c0_12 = arith.constant 0 : index
    %c0_13 = arith.constant 0 : index
    %52 = vector.load %arg4[%c0_12, %c0_13] : memref<1x128xf32, #tpu.memory_space<vmem>>, vector<1x128xf32>
    %c0_14 = arith.constant 0 : index
    %c0_15 = arith.constant 0 : index
    %53 = vector.load %arg5[%c0_14, %c0_15] : memref<1x128xf32, #tpu.memory_space<vmem>>, vector<1x128xf32>
    %54 = vector.broadcast %52 : vector<1x128xf32> to vector<16x128xf32>
    %55 = arith.mulf %51, %54 : vector<16x128xf32>
    %56 = vector.broadcast %53 : vector<1x128xf32> to vector<16x128xf32>
    %57 = arith.addf %55, %56 : vector<16x128xf32>
    %c0_16 = arith.constant 0 : index
    %c0_17 = arith.constant 0 : index
    %58 = vector.load %arg6[%c0_16, %c0_17] : memref<16x128xf32, #tpu.memory_space<vmem>>, vector<16x128xf32>
    tpu.vector_store %arg6[%c0_16, %c0_17], %57 {strides = array<i32>} : memref<16x128xf32, #tpu.memory_space<vmem>>, vector<16x128xf32>,
    return
  }
  func.func @transform_0(%arg0: i32, %arg1: memref<1xi32, #tpu.memory_space<smem>>) -> (i32, i32) {
    %c0_i32 = arith.constant 0 : i32
    %c0_i32_0 = arith.constant 0 : i32
    return %arg0, %c0_i32 : i32, i32
  }
  func.func @transform_1(%arg0: i32, %arg1: memref<1xi32, #tpu.memory_space<smem>>) -> (i32, i32) {
    %c0_i32 = arith.constant 0 : i32
    %c0_i32_0 = arith.constant 0 : i32
    return %arg0, %c0_i32 : i32, i32
  }
  func.func @transform_2(%arg0: i32, %arg1: memref<1xi32, #tpu.memory_space<smem>>) -> (i32, i32) {
    %c0_i32 = arith.constant 0 : i32
    %c0_i32_0 = arith.constant 0 : i32
    %c0_i32_1 = arith.constant 0 : i32
    return %c0_i32, %c0_i32_0 : i32, i32
  }
  func.func @transform_3(%arg0: i32, %arg1: memref<1xi32, #tpu.memory_space<smem>>) -> (i32, i32) {
    %c0_i32 = arith.constant 0 : i32
    %c0_i32_0 = arith.constant 0 : i32
    %c0_i32_1 = arith.constant 0 : i32
    return %c0_i32, %c0_i32_0 : i32, i32
  }
  func.func @transform_4(%arg0: i32, %arg1: memref<1xi32, #tpu.memory_space<smem>>) -> (i32, i32) {
    %c0_i32 = arith.constant 0 : i32
    %c0_i32_0 = arith.constant 0 : i32
    return %arg0, %c0_i32 : i32, i32
  }
}

</mosaic_0001>

<llo_original>
// kernel: tpu_custom_call.1
$region0: #{tpu_custom_call.1}
  #allocation0 [shape = 'u32[]', space=smem, size = 0x4, offset = 0x4, fixed_abs, tag = 'smem constant byte address 0x4 - core index']
  #allocation1 [shape = 'u32[72,128]{1,0:T(1,128)}', space=vmem, size = 0x9000, scoped, tag = 'internal scratch']
  #allocation2 [shape = 's32[1]{0}', space=sflag, size = 0x4, scoped, tag = 'scoped memory for tpu_custom_call.1']
  #allocation3 [shape = 's32[1]{0:T(128)S(6)}', space=smem, size = 0x200, scoped, tag = 'prefetched SMEM operand 0']
  %s0 = inlined_call_operand.<no memory space> [shape: s32[1], index: 0, kind: input, shape index: {}]
  %s1 = inlined_call_operand.hbm [shape: f32[16,128], index: 1, kind: input, shape index: {}]
  %s2 = inlined_call_operand.hbm [shape: f32[16,128], index: 2, kind: input, shape index: {}]
  %s3 = inlined_call_operand.vmem [shape: f32[1,128], index: 3, kind: input, shape index: {}]
  %s4 = inlined_call_operand.vmem [shape: f32[1,128], index: 4, kind: input, shape index: {}]
  %s5 = inlined_call_operand.hbm [shape: f32[16,128], index: 5, kind: output, shape index: {}]
  %s6 = sld [smem:[#allocation0]]
  $region34: #{tpu_custom_call.1} parent=0
    _
  %s8 = ssub.s32 1, %s6
  %s9 = scalar_select 0, %s8, %s6
  %10 = sst [smem:[#allocation3]] %s0
  $region1: #{tpu_custom_call.1} parent=0
    #allocation4 [shape = 'u8[8192]{0}', space=vmem, size = 0x2000, scoped, tag = 'input window, operand 1, single buffered']
    #allocation5 [shape = 's32[1]{0}', space=sflag, size = 0x4, scoped, tag = 'scoped memory for tpu_custom_call.1']
    #allocation6 [shape = 's32[1]{0}', space=sflag, size = 0x4, scoped, tag = 'scoped memory for tpu_custom_call.1']
    #allocation7 [shape = 'u8[8192]{0}', space=vmem, size = 0x2000, scoped, tag = 'input window, operand 2, single buffered']
    #allocation8 [shape = 's32[1]{0}', space=sflag, size = 0x4, scoped, tag = 'scoped memory for tpu_custom_call.1']
    #allocation9 [shape = 'u8[8192]{0}', space=vmem, size = 0x2000, scoped, tag = 'output window, operand 0, single buffered']
    %11 = vsyncpa [#allocation5], 0
    %12 = vsyncpa [#allocation8], 0
    %13 = vsyncpa [#allocation6], 0
    // Predicated region
    $region2: #{tpu_custom_call.1} parent=1 // pred_check
      _
    $region3: #{tpu_custom_call.1} parent=1 // pred_check_branch
      %15 = sbr.rel (0) target = $region5
    $region4: #{tpu_custom_call.1} parent=1 // pred_region
      %17 = vsyncadd [#allocation5], 0
      %s18 = sshll.u32 %s1, 4
      %s19 = int_to_ptr.hbm [resolvable:$true] %s18
      %s20 = sshll.u32 [#allocation4], 4
      %s21 = int_to_ptr.vmem [resolvable:$true] %s20
      %26 = dma.hbm_to_vmem [thread:$0]  %s19, 256, %s21, [#allocation5], 128, 128, 8
    $region5: #{tpu_custom_call.1} parent=1 // pred_fallthru
      _
    // Predicated region
    $region6: #{tpu_custom_call.1} parent=1 // pred_check
      _
    $region7: #{tpu_custom_call.1} parent=1 // pred_check_branch
      %28 = sbr.rel (0) target = $region9
    $region8: #{tpu_custom_call.1} parent=1 // pred_region
      %30 = vsyncadd [#allocation8], 0
      %s31 = sshll.u32 %s2, 4
      %s32 = int_to_ptr.hbm [resolvable:$true] %s31
      %s33 = sshll.u32 [#allocation7], 4
      %s34 = int_to_ptr.vmem [resolvable:$true] %s33
      %39 = dma.hbm_to_vmem [thread:$0]  %s32, 256, %s34, [#allocation8], 128, 128, 8
    $region9: #{tpu_custom_call.1} parent=1 // pred_fallthru
      _
    // Predicated region
    $region10: #{tpu_custom_call.1} parent=1 // pred_check
      _
    $region11: #{tpu_custom_call.1} parent=1 // pred_check_branch
      %41 = sbr.rel (0) target = $region13
    $region12: #{tpu_custom_call.1} parent=1 // pred_region
      _
    $region13: #{tpu_custom_call.1} parent=1 // pred_fallthru
      _
    // Predicated region
    $region14: #{tpu_custom_call.1} parent=1 // pred_check
      _
    $region15: #{tpu_custom_call.1} parent=1 // pred_check_branch
      %43 = sbr.rel (0) target = $region17
    $region16: #{tpu_custom_call.1} parent=1 // pred_region
      _
    $region17: #{tpu_custom_call.1} parent=1 // pred_fallthru
      _
    // Predicated region
    $region18: #{tpu_custom_call.1} parent=1 // pred_check
      _
    $region19: #{tpu_custom_call.1} parent=1 // pred_check_branch
      %45 = sbr.rel (0) target = $region21
    $region20: #{tpu_custom_call.1} parent=1 // pred_region
      %47 = dma.done [#allocation5], 256
    $region21: #{tpu_custom_call.1} parent=1 // pred_fallthru
      _
    // Predicated region
    $region22: #{tpu_custom_call.1} parent=1 // pred_check
      _
    $region23: #{tpu_custom_call.1} parent=1 // pred_check_branch
      %49 = sbr.rel (0) target = $region25
    $region24: #{tpu_custom_call.1} parent=1 // pred_region
      %51 = dma.done [#allocation8], 256
    $region25: #{tpu_custom_call.1} parent=1 // pred_fallthru
      _
    %v52 = vld [vmem:[#allocation4] sm:$0xff]
    %v53 = vld [vmem:[#allocation4 + $0x8] sm:$0xff]
    %v54 = vld [vmem:[#allocation7] sm:$0xff]
    %v55 = vld [vmem:[#allocation7 + $0x8] sm:$0xff]
    %v56 = vlaneseq
    %v57 = vshrl.u32 %v56, 7
    %v58 = vadd.s32 %v57, 8
    %s59 = smul.u32 0, 16
    %v60 = vstv %s59
    %v61 = vadd.s32 %v57, %v60
    %v62 = vadd.s32 %v58, %v60
    %v63 = vlaneseq
    %v64 = vand.u32 %v63, 127
    %v65 = vmul.u32 %v61, 128
    %v66 = vmul.u32 %v62, 128
    %v67 = vadd.s32 %v65, %v64
    %v68 = vadd.s32 %v66, %v64
    %s69 = sld [smem:[#allocation3]]
    %s70 = smul.u32 %s69, 2654435769
    %v71 = vstv %s70
    %v72 = vadd.s32 %v67, %v71
    %v73 = vadd.s32 %v68, %v71
    %v74 = vshrl.u32 %v72, 16
    %v75 = vshrl.u32 %v73, 16
    %v76 = vxor.u32 %v72, %v74
    %v77 = vxor.u32 %v73, %v75
    %v78 = vmul.u32 %v76, 2146121005
    %v79 = vmul.u32 %v77, 2146121005
    %v80 = vshrl.u32 %v78, 15
    %v81 = vshrl.u32 %v79, 15
    %v82 = vxor.u32 %v78, %v80
    %v83 = vxor.u32 %v79, %v81
    %v84 = vmul.u32 %v82, 2221565579
    %v85 = vmul.u32 %v83, 2221565579
    %v86 = vshrl.u32 %v84, 16
    %v87 = vshrl.u32 %v85, 16
    %v88 = vxor.u32 %v84, %v86
    %v89 = vxor.u32 %v85, %v87
    %v90 = vshrl.u32 %v88, 8
    %v91 = vshrl.u32 %v89, 8
    %vm92 = vcmp.ge.s32.totalorder %v90, 1677722
    %vm93 = vcmp.ge.s32.totalorder %v91, 1677722
    %v94 = vmul.f32 %v52, 1.1111112
    %v95 = vmul.f32 %v53, 1.1111112
    %v96 = vsel %vm92, %v94, 0.0
    %v97 = vsel %vm93, %v95, 0.0
    %v98 = vadd.f32 %v96, %v54
    %v99 = vadd.f32 %v97, %v55
    %100 = vadd.xlane.f32.xlu0 %v98
    %v101 = vpop.xlane.xlu0 %100
    %102 = vadd.xlane.f32.xlu0 %v99
    %v103 = vpop.xlane.xlu0 %102
    %v104 = vrcp.pop 128.0
    %v105 = vmul.f32 128.0, %v104
    %v106 = vsub.f32 1.0, %v105
    %v107 = vmul.f32 %v104, %v106
    %v108 = vadd.f32 %v104, %v107
    %vm109 = vweird.f32 %v104
    %v110 = vsel %vm109, %v104, %v108
    %v111 = vmul.f32 %v101, %v110
    %v112 = vmul.f32 %v103, %v110
    %v113 = vsub.f32 %v98, %v111
    %v114 = vsub.f32 %v99, %v112
    %v115 = vmul.f32 %v113, %v113
    %v116 = vmul.f32 %v114, %v114
    %117 = vadd.xlane.f32.xlu0 %v115
    %v118 = vpop.xlane.xlu0 %117
    %119 = vadd.xlane.f32.xlu0 %v116
    %v120 = vpop.xlane.xlu0 %119
    %v121 = vmul.f32 %v118, %v110
    %v122 = vmul.f32 %v120, %v110
    %v123 = vadd.f32 %v121, 1e-05
    %v124 = vadd.f32 %v122, 1e-05
    %v125 = vrsqrt.pop %v123
    %v126 = vmul.f32 %v125, %v123
    %v127 = vmul.f32 %v126, %v125
    %v128 = vmul.f32 0.5, %v127
    %v129 = vsub.f32 1.5, %v128
    %v130 = vmul.f32 %v125, %v129
    %vm131 = vweird.f32 %v123
    %vm132 = vweird.f32 %v125
    %vm133 = vmor %vm131, %vm132
    %v134 = vsel %vm133, %v125, %v130
    %v135 = vrsqrt.pop %v124
    %v136 = vmul.f32 %v135, %v124
    %v137 = vmul.f32 %v136, %v135
    %v138 = vmul.f32 0.5, %v137
    %v139 = vsub.f32 1.5, %v138
    %v140 = vmul.f32 %v135, %v139
    %vm141 = vweird.f32 %v124
    %vm142 = vweird.f32 %v135
    %vm143 = vmor %vm141, %vm142
    %v144 = vsel %vm143, %v135, %v140
    %v145 = vmul.f32 %v113, %v134
    %v146 = vmul.f32 %v114, %v144
    %v147 = vld [vmem:[%s3] sm:$0x1]
    %v148 = vld [vmem:[%s4] sm:$0x1]
    %v150 = vperm.slane %v147, 0
    %v152 = vmul.f32 %v145, %v150
    %v153 = vmul.f32 %v146, %v150
    %v155 = vperm.slane %v148, 0
    %v157 = vadd.f32 %v152, %v155
    %v158 = vadd.f32 %v153, %v155
    %159 = vst [vmem:[#allocation9] sm:$0xff] %v157
    %160 = vst [vmem:[#allocation9 + $0x8] sm:$0xff] %v158
    // Predicated region
    $region26: #{tpu_custom_call.1} parent=1 // pred_check
      _
    $region27: #{tpu_custom_call.1} parent=1 // pred_check_branch
      %162 = sbr.rel (0) target = $region29
    $region28: #{tpu_custom_call.1} parent=1 // pred_region
      %164 = vsyncadd [#allocation6], 0
      %s165 = sshll.u32 [#allocation9], 4
      %s166 = int_to_ptr.vmem [resolvable:$true] %s165
      %s167 = sshll.u32 %s5, 4
      %s168 = int_to_ptr.hbm [resolvable:$true] %s167
      %173 = dma.vmem_to_hbm [thread:$0]  %s166, 256, %s168, [#allocation6], 128, 128, 8
    $region29: #{tpu_custom_call.1} parent=1 // pred_fallthru
      _
    // Predicated region
    $region30: #{tpu_custom_call.1} parent=1 // pred_check
      _
    $region31: #{tpu_custom_call.1} parent=1 // pred_check_branch
      %175 = sbr.rel (0) target = $region33
    $region32: #{tpu_custom_call.1} parent=1 // pred_region
      %177 = dma.done [#allocation6], 256
    $region33: #{tpu_custom_call.1} parent=1 // pred_fallthru
      _
    %178 = vsyncpa [#allocation5], 1
    %179 = vsyncpa [#allocation8], 1
    %180 = vsyncpa [#allocation6], 1

</llo_original>
